<compile_context>
chip_gen: v7x
topology: tpu7x:2x2x1
jax: 0.10.0
libtpu: 0.0.40
codegen_flags: <defaults>
</compile_context>

<pallas_src>
import functools

import jax
import jax.numpy as jnp
from jax.experimental import pallas as pl
from jax.experimental.pallas import tpu as pltpu

IN_DIM = 9
HID_DIM = 128
ENC_DIM = 64
PROJ_DIM = 9
FUSED_DIM = 128  # lanes 0..63 = enc, lanes 64..72 = proj, rest = padding


def _round_up(n, m):
    return ((n + m - 1) // m) * m


def _contrastive_encoder_kernel(
    x_ref,      # [TB, 9]    input tile (f32 in HBM, cast to compute dtype here)
    w1_ref,     # [9, 128]   compute dtype (e.g. bf16), resident across grid steps
    b1_ref,     # [1, 128]   f32
    w2_ref,     # [128, 64]  compute dtype
    b2_ref,     # [1, 64]    f32
    w3_ref,     # [64, 64]   compute dtype (real w3 in cols 0..8, zero padding after)
    b3_ref,     # [1, 64]    f32 (real b3 in cols 0..8, zeros after)
    out_ref,    # [TB, 128]  fused lane-dense output: [enc | proj_padded]
):
    cdt = w1_ref.dtype
    x = x_ref[...].astype(cdt)

    # encoder: Linear(9,128) + ReLU   (f32 accumulation on the MXU)
    h1 = jnp.dot(x, w1_ref[...], preferred_element_type=jnp.float32) + b1_ref[...]
    h1 = jnp.maximum(h1, 0.0)

    # encoder: Linear(128,64) + ReLU
    h2 = jnp.dot(h1.astype(cdt), w2_ref[...],
                 preferred_element_type=jnp.float32) + b2_ref[...]
    h2 = jnp.maximum(h2, 0.0)

    # projector: Linear(64,9->padded 64) + Sigmoid
    logits = jnp.dot(h2.astype(cdt), w3_ref[...],
                     preferred_element_type=jnp.float32) + b3_ref[...]
    proj = jax.nn.sigmoid(logits)  # lanes 9..63 are sigmoid(0)=0.5 padding, sliced off later

    # Fused, lane-dense (128-wide) output block -> unmasked full-lane HBM writeback.
    out_ref[:, 0:ENC_DIM] = h2.astype(out_ref.dtype)
    out_ref[:, ENC_DIM:FUSED_DIM] = proj.astype(out_ref.dtype)


@functools.partial(jax.jit, static_argnames=("block_rows", "compute_dtype", "out_dtype"))
def contrastive_encoder_forward(x, params, block_rows=2048,
                                compute_dtype=jnp.bfloat16, out_dtype=jnp.float32):
    """x: [B, 9] float32. params: dict of (w1, b1, w2, b2, w3, b3), weights [in, out].

    Returns (enc [B, 64], m_predict [B, 9]) like the PyTorch module's forward().
    """
    B = x.shape[0]
    TB = min(int(block_rows), _round_up(B, 8))        # sublane-aligned batch tile
    num_blocks = pl.cdiv(B, TB)
    B_pad = num_blocks * TB
    if B_pad != B:
        x = jnp.pad(x, ((0, B_pad - B), (0, 0)))      # tail tile: pad, slice away after

    # MXU operands in compute_dtype (bf16 by default); biases stay f32 (post-matmul add).
    w1 = params["w1"].astype(compute_dtype)
    w2 = params["w2"].astype(compute_dtype)
    w3 = jnp.pad(params["w3"], ((0, 0), (0, ENC_DIM - PROJ_DIM))).astype(compute_dtype)
    b1 = params["b1"].astype(jnp.float32)
    b2 = params["b2"].astype(jnp.float32)
    b3 = jnp.pad(params["b3"], ((0, 0), (0, ENC_DIM - PROJ_DIM))).astype(jnp.float32)

    const2 = lambda i: (0, 0)  # weights/biases: same block every step -> stay resident
    in_specs = [
        pl.BlockSpec((TB, IN_DIM), lambda i: (i, 0)),
        pl.BlockSpec(w1.shape, const2), pl.BlockSpec(b1.shape, const2),
        pl.BlockSpec(w2.shape, const2), pl.BlockSpec(b2.shape, const2),
        pl.BlockSpec(w3.shape, const2), pl.BlockSpec(b3.shape, const2),
    ]
    out_specs = pl.BlockSpec((TB, FUSED_DIM), lambda i: (i, 0))

    w_bytes = sum(int(a.size) * jnp.dtype(a.dtype).itemsize
                  for a in (w1, b1, w2, b2, w3, b3))
    cost = pl.CostEstimate(
        flops=2 * B_pad * (IN_DIM * HID_DIM + HID_DIM * ENC_DIM + ENC_DIM * ENC_DIM),
        transcendentals=B_pad * ENC_DIM,  # sigmoid on padded 64-wide logits
        bytes_accessed=(B_pad * IN_DIM * jnp.dtype(x.dtype).itemsize
                        + w_bytes
                        + B_pad * FUSED_DIM * jnp.dtype(out_dtype).itemsize),
    )

    fused = pl.pallas_call(
        _contrastive_encoder_kernel,
        out_shape=jax.ShapeDtypeStruct((B_pad, FUSED_DIM), out_dtype),
        grid=(num_blocks,),
        in_specs=in_specs,
        out_specs=out_specs,
        compiler_params=pltpu.CompilerParams(
            dimension_semantics=("parallel",),      # megacore sharding on v7x
            vmem_limit_bytes=32 * 1024 * 1024,      # safe on v5e (16 MiB default) .. v7x (64 MiB phys)
        ),
        cost_estimate=cost,
    )(x, w1, b1, w2, b2, w3, b3)

    enc = fused[:B, :ENC_DIM]
    m_predict = fused[:B, ENC_DIM:ENC_DIM + PROJ_DIM]
    return enc, m_predict


def init_params(key):
    """Deterministic init mimicking PyTorch nn.Linear default (uniform +/- 1/sqrt(fan_in)).
    Weights stored as [in_features, out_features]; biases as [1, out_features]."""
    def linear(k, fan_in, fan_out):
        kw, kb = jax.random.split(k)
        bound = 1.0 / jnp.sqrt(fan_in)
        w = jax.random.uniform(kw, (fan_in, fan_out), jnp.float32, -bound, bound)
        b = jax.random.uniform(kb, (1, fan_out), jnp.float32, -bound, bound)
        return w, b

    k1, k2, k3 = jax.random.split(key, 3)
    w1, b1 = linear(k1, IN_DIM, HID_DIM)
    w2, b2 = linear(k2, HID_DIM, ENC_DIM)
    w3, b3 = linear(k3, ENC_DIM, PROJ_DIM)
    return {"w1": w1, "b1": b1, "w2": w2, "b2": b2, "w3": w3, "b3": b3}


def _reference_forward(x, p, compute_dtype=jnp.bfloat16):
    """Pure-JAX reference with the same operand dtypes / f32 accumulation as the kernel."""
    f32 = jnp.float32
    w1 = p["w1"].astype(compute_dtype)
    w2 = p["w2"].astype(compute_dtype)
    w3 = p["w3"].astype(compute_dtype)
    h1 = jnp.maximum(jnp.dot(x.astype(compute_dtype), w1, preferred_element_type=f32) + p["b1"], 0.0)
    h2 = jnp.maximum(jnp.dot(h1.astype(compute_dtype), w2, preferred_element_type=f32) + p["b2"], 0.0)
    proj = jax.nn.sigmoid(jnp.dot(h2.astype(compute_dtype), w3, preferred_element_type=f32) + p["b3"])
    return h2, proj


if __name__ == "__main__":
    key = jax.random.PRNGKey(0)
    k_params, k_x = jax.random.split(key)

    params = init_params(k_params)
    x = jax.random.normal(k_x, (8, IN_DIM), jnp.float32)  # batch=8, features=9

    enc, m_predict = contrastive_encoder_forward(x, params)
    enc = jax.block_until_ready(enc)
    m_predict = jax.block_until_ready(m_predict)

    # sanity-check against a pure-JAX reference of the same math (bf16 MXU operands, f32 accum)
    enc_ref, proj_ref = _reference_forward(x, params)
    assert enc.shape == (8, ENC_DIM) and m_predict.shape == (8, PROJ_DIM)
    assert jnp.allclose(enc, enc_ref, atol=2e-3, rtol=2e-3)
    assert jnp.allclose(m_predict, proj_ref, atol=2e-3, rtol=2e-3)

    print("KERNEL_OK")
</pallas_src>

<mosaic_0001>
module attributes {stable_mosaic.version = 11 : i64} {
  func.func @_contrastive_encoder_kernel(%arg0: i32, %arg1: memref<8x9xf32, #tpu.memory_space<vmem>>, %arg2: memref<9x128xbf16, #tpu.memory_space<vmem>>, %arg3: memref<1x128xf32, #tpu.memory_space<vmem>>, %arg4: memref<128x64xbf16, #tpu.memory_space<vmem>>, %arg5: memref<1x64xf32, #tpu.memory_space<vmem>>, %arg6: memref<64x64xbf16, #tpu.memory_space<vmem>>, %arg7: memref<1x64xf32, #tpu.memory_space<vmem>>, %arg8: memref<8x128xf32, #tpu.memory_space<vmem>>) attributes {dimension_semantics = [#tpu.dimension_semantics<parallel>], iteration_bounds = array<i64: 1>, scalar_prefetch = 0 : i64, scratch_operands = 0 : i64, tpu.core_type = #tpu.core_type<tc>, window_params = [{transform_indices = @transform_0, window_bounds = array<i64: 8, 9>}, {pipeline_mode = #tpu.pipeline_mode<synchronous>, transform_indices = @transform_1, window_bounds = array<i64: 9, 128>}, {pipeline_mode = #tpu.pipeline_mode<synchronous>, transform_indices = @transform_2, window_bounds = array<i64: 1, 128>}, {pipeline_mode = #tpu.pipeline_mode<synchronous>, transform_indices = @transform_3, window_bounds = array<i64: 128, 64>}, {pipeline_mode = #tpu.pipeline_mode<synchronous>, transform_indices = @transform_4, window_bounds = array<i64: 1, 64>}, {pipeline_mode = #tpu.pipeline_mode<synchronous>, transform_indices = @transform_5, window_bounds = array<i64: 64, 64>}, {pipeline_mode = #tpu.pipeline_mode<synchronous>, transform_indices = @transform_6, window_bounds = array<i64: 1, 64>}, {transform_indices = @transform_7, window_bounds = array<i64: 8, 128>}]} {
    %c0 = arith.constant 0 : index
    %c0_0 = arith.constant 0 : index
    %0 = vector.load %arg1[%c0, %c0_0] : memref<8x9xf32, #tpu.memory_space<vmem>>, vector<8x9xf32>
    %1 = arith.truncf %0 : vector<8x9xf32> to vector<8x9xbf16>
    %c0_1 = arith.constant 0 : index
    %c0_2 = arith.constant 0 : index
    %2 = vector.load %arg2[%c0_1, %c0_2] : memref<9x128xbf16, #tpu.memory_space<vmem>>, vector<9x128xbf16>
    %cst = arith.constant dense<0.000000e+00> : vector<8x128xf32>
    %3 = tpu.matmul %1, %2, %cst {dimension_numbers = #tpu.dot_dimension_numbers<[1], [0], [0], [1], [0, 0, 1, 1], [], []>} : vector<8x9xbf16>, vector<9x128xbf16>, vector<8x128xf32> -> vector<8x128xf32>
    %c0_3 = arith.constant 0 : index
    %c0_4 = arith.constant 0 : index
    %4 = vector.load %arg3[%c0_3, %c0_4] : memref<1x128xf32, #tpu.memory_space<vmem>>, vector<1x128xf32>
    %5 = vector.broadcast %4 : vector<1x128xf32> to vector<8x128xf32>
    %6 = arith.addf %3, %5 : vector<8x128xf32>
    %cst_5 = arith.constant 0.000000e+00 : f32
    %7 = vector.broadcast %cst_5 : f32 to vector<8x128xf32>
    %8 = arith.maximumf %6, %7 : vector<8x128xf32>
    %9 = arith.truncf %8 : vector<8x128xf32> to vector<8x128xbf16>
    %c0_6 = arith.constant 0 : index
    %c0_7 = arith.constant 0 : index
    %10 = vector.load %arg4[%c0_6, %c0_7] : memref<128x64xbf16, #tpu.memory_space<vmem>>, vector<128x64xbf16>
    %cst_8 = arith.constant dense<0.000000e+00> : vector<8x64xf32>
    %11 = tpu.matmul %9, %10, %cst_8 {dimension_numbers = #tpu.dot_dimension_numbers<[1], [0], [0], [1], [0, 0, 1, 1], [], []>} : vector<8x128xbf16>, vector<128x64xbf16>, vector<8x64xf32> -> vector<8x64xf32>
    %c0_9 = arith.constant 0 : index
    %c0_10 = arith.constant 0 : index
    %12 = vector.load %arg5[%c0_9, %c0_10] : memref<1x64xf32, #tpu.memory_space<vmem>>, vector<1x64xf32>
    %13 = vector.broadcast %12 : vector<1x64xf32> to vector<8x64xf32>
    %14 = arith.addf %11, %13 : vector<8x64xf32>
    %cst_11 = arith.constant 0.000000e+00 : f32
    %15 = vector.broadcast %cst_11 : f32 to vector<8x64xf32>
    %16 = arith.maximumf %14, %15 : vector<8x64xf32>
    %17 = arith.truncf %16 : vector<8x64xf32> to vector<8x64xbf16>
    %c0_12 = arith.constant 0 : index
    %c0_13 = arith.constant 0 : index
    %18 = vector.load %arg6[%c0_12, %c0_13] : memref<64x64xbf16, #tpu.memory_space<vmem>>, vector<64x64xbf16>
    %cst_14 = arith.constant dense<0.000000e+00> : vector<8x64xf32>
    %19 = tpu.matmul %17, %18, %cst_14 {dimension_numbers = #tpu.dot_dimension_numbers<[1], [0], [0], [1], [0, 0, 1, 1], [], []>} : vector<8x64xbf16>, vector<64x64xbf16>, vector<8x64xf32> -> vector<8x64xf32>
    %c0_15 = arith.constant 0 : index
    %c0_16 = arith.constant 0 : index
    %20 = vector.load %arg7[%c0_15, %c0_16] : memref<1x64xf32, #tpu.memory_space<vmem>>, vector<1x64xf32>
    %21 = vector.broadcast %20 : vector<1x64xf32> to vector<8x64xf32>
    %22 = arith.addf %19, %21 : vector<8x64xf32>
    %23 = arith.negf %22 : vector<8x64xf32>
    %24 = math.exp %23 : vector<8x64xf32>
    %cst_17 = arith.constant 1.000000e+00 : f32
    %25 = vector.broadcast %cst_17 : f32 to vector<8x64xf32>
    %26 = arith.addf %25, %24 : vector<8x64xf32>
    %27 = arith.divf %25, %26 : vector<8x64xf32>
    %c0_18 = arith.constant 0 : index
    %c0_19 = arith.constant 0 : index
    %28 = vector.load %arg8[%c0_18, %c0_19] : memref<8x128xf32, #tpu.memory_space<vmem>>, vector<8x64xf32>
    tpu.vector_store %arg8[%c0_18, %c0_19], %16 {strides = array<i32>} : memref<8x128xf32, #tpu.memory_space<vmem>>, vector<8x64xf32>,
    %c0_20 = arith.constant 0 : index
    %c64 = arith.constant 64 : index
    %29 = vector.load %arg8[%c0_20, %c64] : memref<8x128xf32, #tpu.memory_space<vmem>>, vector<8x64xf32>
    tpu.vector_store %arg8[%c0_20, %c64], %27 {strides = array<i32>} : memref<8x128xf32, #tpu.memory_space<vmem>>, vector<8x64xf32>,
    return
  }
  func.func @transform_0(%arg0: i32) -> (i32, i32) {
    %c0_i32 = arith.constant 0 : i32
    %c0_i32_0 = arith.constant 0 : i32
    return %arg0, %c0_i32 : i32, i32
  }
  func.func @transform_1(%arg0: i32) -> (i32, i32) {
    %c0_i32 = arith.constant 0 : i32
    %c0_i32_0 = arith.constant 0 : i32
    %c0_i32_1 = arith.constant 0 : i32
    return %c0_i32, %c0_i32_0 : i32, i32
  }
  func.func @transform_2(%arg0: i32) -> (i32, i32) {
    %c0_i32 = arith.constant 0 : i32
    %c0_i32_0 = arith.constant 0 : i32
    %c0_i32_1 = arith.constant 0 : i32
    return %c0_i32, %c0_i32_0 : i32, i32
  }
  func.func @transform_3(%arg0: i32) -> (i32, i32) {
    %c0_i32 = arith.constant 0 : i32
    %c0_i32_0 = arith.constant 0 : i32
    %c0_i32_1 = arith.constant 0 : i32
    return %c0_i32, %c0_i32_0 : i32, i32
  }
  func.func @transform_4(%arg0: i32) -> (i32, i32) {
    %c0_i32 = arith.constant 0 : i32
    %c0_i32_0 = arith.constant 0 : i32
    %c0_i32_1 = arith.constant 0 : i32
    return %c0_i32, %c0_i32_0 : i32, i32
  }
  func.func @transform_5(%arg0: i32) -> (i32, i32) {
    %c0_i32 = arith.constant 0 : i32
    %c0_i32_0 = arith.constant 0 : i32
    %c0_i32_1 = arith.constant 0 : i32
    return %c0_i32, %c0_i32_0 : i32, i32
  }
  func.func @transform_6(%arg0: i32) -> (i32, i32) {
    %c0_i32 = arith.constant 0 : i32
    %c0_i32_0 = arith.constant 0 : i32
    %c0_i32_1 = arith.constant 0 : i32
    return %c0_i32, %c0_i32_0 : i32, i32
  }
  func.func @transform_7(%arg0: i32) -> (i32, i32) {
    %c0_i32 = arith.constant 0 : i32
    %c0_i32_0 = arith.constant 0 : i32
    return %arg0, %c0_i32 : i32, i32
  }
}

</mosaic_0001>

<llo_original>
// kernel: contrastive_encoder_forward.1
$region0: #{contrastive_encoder_forward.1}
  #allocation0 [shape = 'u32[]', space=smem, size = 0x4, offset = 0x4, fixed_abs, tag = 'smem constant byte address 0x4 - core index']
  #allocation1 [shape = 'u32[144,128]{1,0:T(1,128)}', space=vmem, size = 0x12000, scoped, tag = 'internal scratch']
  %s0 = inlined_call_operand.vmem [shape: f32[8,9], index: 0, kind: input, shape index: {}]
  %s1 = inlined_call_operand.vmem [shape: bf16[9,128], index: 1, kind: input, shape index: {}]
  %s2 = inlined_call_operand.vmem [shape: f32[1,128], index: 2, kind: input, shape index: {}]
  %s3 = inlined_call_operand.vmem [shape: bf16[128,64], index: 3, kind: input, shape index: {}]
  %s4 = inlined_call_operand.vmem [shape: f32[1,64], index: 4, kind: input, shape index: {}]
  %s5 = inlined_call_operand.vmem [shape: bf16[64,64], index: 5, kind: input, shape index: {}]
  %s6 = inlined_call_operand.vmem [shape: f32[1,64], index: 6, kind: input, shape index: {}]
  %s7 = inlined_call_operand.vmem [shape: f32[8,128], index: 7, kind: output, shape index: {}]
  %s8 = sld [smem:[#allocation0]]
  $region38: #{contrastive_encoder_forward.1} parent=0
    _
  %s10 = ssub.s32 1, %s8
  %s11 = scalar_select 0, %s10, %s8
  // Predicated region
  $region2: #{contrastive_encoder_forward.1} parent=0 // pred_check
    _
  $region3: #{contrastive_encoder_forward.1} parent=0 // pred_check_branch
    %13 = sbr.rel (0) target = $region5
  $region4: #{contrastive_encoder_forward.1} parent=0 // pred_region
    _
  $region5: #{contrastive_encoder_forward.1} parent=0 // pred_fallthru
    _
  // Predicated region
  $region6: #{contrastive_encoder_forward.1} parent=0 // pred_check
    _
  $region7: #{contrastive_encoder_forward.1} parent=0 // pred_check_branch
    %15 = sbr.rel (0) target = $region9
  $region8: #{contrastive_encoder_forward.1} parent=0 // pred_region
    _
  $region9: #{contrastive_encoder_forward.1} parent=0 // pred_fallthru
    _
  // Predicated region
  $region10: #{contrastive_encoder_forward.1} parent=0 // pred_check
    _
  $region11: #{contrastive_encoder_forward.1} parent=0 // pred_check_branch
    %17 = sbr.rel (0) target = $region13
  $region12: #{contrastive_encoder_forward.1} parent=0 // pred_region
    _
  $region13: #{contrastive_encoder_forward.1} parent=0 // pred_fallthru
    _
  // Predicated region
  $region14: #{contrastive_encoder_forward.1} parent=0 // pred_check
    _
  $region15: #{contrastive_encoder_forward.1} parent=0 // pred_check_branch
    %19 = sbr.rel (0) target = $region17
  $region16: #{contrastive_encoder_forward.1} parent=0 // pred_region
    _
  $region17: #{contrastive_encoder_forward.1} parent=0 // pred_fallthru
    _
  // Predicated region
  $region18: #{contrastive_encoder_forward.1} parent=0 // pred_check
    _
  $region19: #{contrastive_encoder_forward.1} parent=0 // pred_check_branch
    %21 = sbr.rel (0) target = $region21
  $region20: #{contrastive_encoder_forward.1} parent=0 // pred_region
    _
  $region21: #{contrastive_encoder_forward.1} parent=0 // pred_fallthru
    _
  // Predicated region
  $region22: #{contrastive_encoder_forward.1} parent=0 // pred_check
    _
  $region23: #{contrastive_encoder_forward.1} parent=0 // pred_check_branch
    %23 = sbr.rel (0) target = $region25
  $region24: #{contrastive_encoder_forward.1} parent=0 // pred_region
    _
  $region25: #{contrastive_encoder_forward.1} parent=0 // pred_fallthru
    _
  // Predicated region
  $region26: #{contrastive_encoder_forward.1} parent=0 // pred_check
    _
  $region27: #{contrastive_encoder_forward.1} parent=0 // pred_check_branch
    %25 = sbr.rel (0) target = $region29
  $region28: #{contrastive_encoder_forward.1} parent=0 // pred_region
    _
  $region29: #{contrastive_encoder_forward.1} parent=0 // pred_fallthru
    _
  %v27 = vld [vmem:[%s0] sm:$0xff]
  %v28 = vpack.c.bf16 %v27, %v27
  %v29 = vld [vmem:[%s1] sm:$0xf]
  %v30 = vld [vmem:[%s1 + $0x4] sm:$0x1]
  %v31 = vld [vmem:[%s2] sm:$0x1]
  %v33 = vlaneseq
  %v34 = vshrl.u32 %v33, 7
  %v35 = vsub.s32 0, %v34
  %v36 = vrot.slane %v31, %v35
  %v40 = vunpack.c.l.b16 %v29
  %v41 = vunpack.c.l.b16 %v30
  %v42 = vpack.c.b16 %v41, %v40
  %vm43 = vcmask 72704
  %v45 = vsel %vm43, %v28, 0
  %vm47 = vcmask 1043456
  %vm48 = vcmask 1044480
  %v49 = vsel %vm47, 4294967295, 65535
  %v50 = vsel %vm48, %v49, 0
  %v52 = vand.u32 %v42, %v50
  %54 = vmatprep.subr.bf16.mxu0 0
  %55 = vmatpush1.bf16.msra.mxu0 %v52
  %56 = vmatprep.subr.bf16.mxu0 0
  %57 = vmatpush1.bf16.msra.mxu0 0
  %58 = vmatprep.subr.bf16.mxu0 0
  %59 = vmatpush1.bf16.msra.mxu0 0
  %60 = vmatprep.subr.bf16.mxu0 0
  %61 = vmatpush1.bf16.msra.mxu0 0
  %62 = vmatprep.subr.bf16.mxu0 0
  %63 = vmatpush1.bf16.msra.mxu0 0
  %64 = vmatprep.subr.bf16.mxu0 0
  %65 = vmatpush1.bf16.msra.mxu0 0
  %66 = vmatprep.subr.bf16.mxu0 0
  %67 = vmatpush1.bf16.msra.mxu0 0
  %68 = vmatprep.subr.bf16.mxu0 0
  %69 = vmatpush1.bf16.msra.mxu0 0
  %70 = vmatprep.subr.bf16.mxu0 0
  %71 = vmatpush1.bf16.msra.mxu0 0
  %72 = vmatprep.subr.bf16.mxu0 0
  %73 = vmatpush1.bf16.msra.mxu0 0
  %74 = vmatprep.subr.bf16.mxu0 0
  %75 = vmatpush1.bf16.msra.mxu0 0
  %76 = vmatprep.subr.bf16.mxu0 0
  %77 = vmatpush1.bf16.msra.mxu0 0
  %78 = vmatprep.subr.bf16.mxu0 0
  %79 = vmatpush1.bf16.msra.mxu0 0
  %80 = vmatprep.subr.bf16.mxu0 0
  %81 = vmatpush1.bf16.msra.mxu0 0
  %82 = vmatprep.subr.bf16.mxu0 0
  %83 = vmatpush1.bf16.msra.mxu0 0
  %84 = vmatprep.subr.bf16.mxu0 0
  %85 = vmatpush1.bf16.msra.mxu0 0
  %86 = vmatprep.mubr.bf16.mxu0 0
  %87 = vmatmul.mubr.bf16.gmra.mrb[0].mxu0 %v45
  %v88 = vpop.f32.mrb[0].mxu0
  %v89 = vadd.f32 %v36, %v88
  %v90 = vpop.f32.mrb[0].mxu0
  %v91 = vpop.f32.mrb[0].mxu0
  %v92 = vpop.f32.mrb[0].mxu0
  %93 = vdwg.mxu0
  %v94 = vmax.f32 %v89, 0.0
  %v95 = vpack.c.bf16 %v94, %v94
  %v96 = vld [vmem:[%s3] sm:$0xf]
  %v97 = vld [vmem:[%s3 + $0x4] sm:$0xf]
  %v98 = vld [vmem:[%s3 + $0x8] sm:$0xf]
  %v99 = vld [vmem:[%s3 + $0xc] sm:$0xf]
  %v100 = vld [vmem:[%s3 + $0x10] sm:$0xf]
  %v101 = vld [vmem:[%s3 + $0x14] sm:$0xf]
  %v102 = vld [vmem:[%s3 + $0x18] sm:$0xf]
  %v103 = vld [vmem:[%s3 + $0x1c] sm:$0xf]
  %v104 = vld [vmem:[%s3 + $0x20] sm:$0xf]
  %v105 = vld [vmem:[%s3 + $0x24] sm:$0xf]
  %v106 = vld [vmem:[%s3 + $0x28] sm:$0xf]
  %v107 = vld [vmem:[%s3 + $0x2c] sm:$0xf]
  %v108 = vld [vmem:[%s3 + $0x30] sm:$0xf]
  %v109 = vld [vmem:[%s3 + $0x34] sm:$0xf]
  %v110 = vld [vmem:[%s3 + $0x38] sm:$0xf]
  %v111 = vld [vmem:[%s3 + $0x3c] sm:$0xf]
  %v112 = vld [vmem:[%s4] sm:$0x1]
  %v114 = vlaneseq
  %v115 = vshrl.u32 %v114, 7
  %v116 = vsub.s32 0, %v115
  %v117 = vrot.slane %v112, %v116
  %v135 = vunpack.c.l.b16 %v96
  %v136 = vunpack.c.l.b16 %v97
  %v137 = vunpack.c.l.b16 %v98
  %v138 = vunpack.c.l.b16 %v99
  %v139 = vunpack.c.l.b16 %v100
  %v140 = vunpack.c.l.b16 %v101
  %v141 = vunpack.c.l.b16 %v102
  %v142 = vunpack.c.l.b16 %v103
  %v143 = vunpack.c.l.b16 %v104
  %v144 = vunpack.c.l.b16 %v105
  %v145 = vunpack.c.l.b16 %v106
  %v146 = vunpack.c.l.b16 %v107
  %v147 = vunpack.c.l.b16 %v108
  %v148 = vunpack.c.l.b16 %v109
  %v149 = vunpack.c.l.b16 %v110
  %v150 = vunpack.c.l.b16 %v111
  %v151 = vpack.c.b16 %v136, %v135
  %v152 = vpack.c.b16 %v138, %v137
  %v153 = vpack.c.b16 %v140, %v139
  %v154 = vpack.c.b16 %v142, %v141
  %v155 = vpack.c.b16 %v144, %v143
  %v156 = vpack.c.b16 %v146, %v145
  %v157 = vpack.c.b16 %v148, %v147
  %v158 = vpack.c.b16 %v150, %v149
  %167 = vmatprep.subr.bf16.mxu0 0
  %168 = vmatpush1.bf16.msra.mxu0 %v151
  %169 = vmatprep.subr.bf16.mxu0 0
  %170 = vmatpush1.bf16.msra.mxu0 %v152
  %171 = vmatprep.subr.bf16.mxu0 0
  %172 = vmatpush1.bf16.msra.mxu0 %v153
  %173 = vmatprep.subr.bf16.mxu0 0
  %174 = vmatpush1.bf16.msra.mxu0 %v154
  %175 = vmatprep.subr.bf16.mxu0 0
  %176 = vmatpush1.bf16.msra.mxu0 %v155
  %177 = vmatprep.subr.bf16.mxu0 0
  %178 = vmatpush1.bf16.msra.mxu0 %v156
  %179 = vmatprep.subr.bf16.mxu0 0
  %180 = vmatpush1.bf16.msra.mxu0 %v157
  %181 = vmatprep.subr.bf16.mxu0 0
  %182 = vmatpush1.bf16.msra.mxu0 %v158
  %183 = vmatprep.subr.bf16.mxu0 0
  %184 = vmatpush1.bf16.msra.mxu0 0
  %185 = vmatprep.subr.bf16.mxu0 0
  %186 = vmatpush1.bf16.msra.mxu0 0
  %187 = vmatprep.subr.bf16.mxu0 0
  %188 = vmatpush1.bf16.msra.mxu0 0
  %189 = vmatprep.subr.bf16.mxu0 0
  %190 = vmatpush1.bf16.msra.mxu0 0
  %191 = vmatprep.subr.bf16.mxu0 0
  %192 = vmatpush1.bf16.msra.mxu0 0
  %193 = vmatprep.subr.bf16.mxu0 0
  %194 = vmatpush1.bf16.msra.mxu0 0
  %195 = vmatprep.subr.bf16.mxu0 0
  %196 = vmatpush1.bf16.msra.mxu0 0
  %197 = vmatprep.subr.bf16.mxu0 0
  %198 = vmatpush1.bf16.msra.mxu0 0
  %199 = vmatprep.mubr.bf16.mxu0 0
  %200 = vmatmul.mubr.bf16.gmra.mrb[0].mxu0 %v95
  %v201 = vpop.f32.mrb[0].mxu0
  %v202 = vadd.f32 %v117, %v201
  %v203 = vpop.f32.mrb[0].mxu0
  %v204 = vpop.f32.mrb[0].mxu0
  %v205 = vpop.f32.mrb[0].mxu0
  %206 = vdwg.mxu0
  %v207 = vmax.f32 %v202, 0.0
  %v208 = vpack.c.bf16 %v207, %v207
  %v209 = vld [vmem:[%s5] sm:$0xf]
  %v210 = vld [vmem:[%s5 + $0x4] sm:$0xf]
  %v211 = vld [vmem:[%s5 + $0x8] sm:$0xf]
  %v212 = vld [vmem:[%s5 + $0xc] sm:$0xf]
  %v213 = vld [vmem:[%s5 + $0x10] sm:$0xf]
  %v214 = vld [vmem:[%s5 + $0x14] sm:$0xf]
  %v215 = vld [vmem:[%s5 + $0x18] sm:$0xf]
  %v216 = vld [vmem:[%s5 + $0x1c] sm:$0xf]
  %v217 = vld [vmem:[%s6] sm:$0x1]
  %v219 = vlaneseq
  %v220 = vshrl.u32 %v219, 7
  %v221 = vsub.s32 0, %v220
  %v222 = vrot.slane %v217, %v221
  %v232 = vunpack.c.l.b16 %v209
  %v233 = vunpack.c.l.b16 %v210
  %v234 = vunpack.c.l.b16 %v211
  %v235 = vunpack.c.l.b16 %v212
  %v236 = vunpack.c.l.b16 %v213
  %v237 = vunpack.c.l.b16 %v214
  %v238 = vunpack.c.l.b16 %v215
  %v239 = vunpack.c.l.b16 %v216
  %v240 = vpack.c.b16 %v233, %v232
  %v241 = vpack.c.b16 %v235, %v234
  %v242 = vpack.c.b16 %v237, %v236
  %v243 = vpack.c.b16 %v239, %v238
  %vm248 = vcmask 523264
  %v250 = vsel %vm248, %v208, 0
  %252 = vmatprep.subr.bf16.mxu0 0
  %253 = vmatpush1.bf16.msra.mxu0 %v240
  %254 = vmatprep.subr.bf16.mxu0 0
  %255 = vmatpush1.bf16.msra.mxu0 %v241
  %256 = vmatprep.subr.bf16.mxu0 0
  %257 = vmatpush1.bf16.msra.mxu0 %v242
  %258 = vmatprep.subr.bf16.mxu0 0
  %259 = vmatpush1.bf16.msra.mxu0 %v243
  %260 = vmatprep.subr.bf16.mxu0 0
  %261 = vmatpush1.bf16.msra.mxu0 0
  %262 = vmatprep.subr.bf16.mxu0 0
  %263 = vmatpush1.bf16.msra.mxu0 0
  %264 = vmatprep.subr.bf16.mxu0 0
  %265 = vmatpush1.bf16.msra.mxu0 0
  %266 = vmatprep.subr.bf16.mxu0 0
  %267 = vmatpush1.bf16.msra.mxu0 0
  %268 = vmatprep.subr.bf16.mxu0 0
  %269 = vmatpush1.bf16.msra.mxu0 0
  %270 = vmatprep.subr.bf16.mxu0 0
  %271 = vmatpush1.bf16.msra.mxu0 0
  %272 = vmatprep.subr.bf16.mxu0 0
  %273 = vmatpush1.bf16.msra.mxu0 0
  %274 = vmatprep.subr.bf16.mxu0 0
  %275 = vmatpush1.bf16.msra.mxu0 0
  %276 = vmatprep.subr.bf16.mxu0 0
  %277 = vmatpush1.bf16.msra.mxu0 0
  %278 = vmatprep.subr.bf16.mxu0 0
  %279 = vmatpush1.bf16.msra.mxu0 0
  %280 = vmatprep.subr.bf16.mxu0 0
  %281 = vmatpush1.bf16.msra.mxu0 0
  %282 = vmatprep.subr.bf16.mxu0 0
  %283 = vmatpush1.bf16.msra.mxu0 0
  %284 = vmatprep.mubr.bf16.mxu0 0
  %285 = vmatmul.mubr.bf16.gmra.mrb[0].mxu0 %v250
  %v286 = vpop.f32.mrb[0].mxu0
  %v287 = vadd.f32 %v222, %v286
  %v288 = vpop.f32.mrb[0].mxu0
  %v289 = vpop.f32.mrb[0].mxu0
  %v290 = vpop.f32.mrb[0].mxu0
  %291 = vdwg.mxu0
  %v292 = vxor.u32 %v287, 2147483648
  %v293 = vmul.f32 %v292, 1.442695
  %v294 = vpow.pop %v293
  %v295 = vadd.f32 %v294, 1.0
  %v296 = vrcp.pop %v295
  %v297 = vmul.f32 1.0, %v296
  %298 = vst.msk [vmem:[%s7] sm:$0xff] %vm248, %v207
  %300 = vrot.lane.b32.xlu0 %v297, 64
  %v301 = vpop.permute.xlu0 %300
  %vm303 = vcmask 1048064
  %304 = vst.msk [vmem:[%s7] sm:$0xff] %vm303, %v301
  // Predicated region
  $region30: #{contrastive_encoder_forward.1} parent=0 // pred_check
    _
  $region31: #{contrastive_encoder_forward.1} parent=0 // pred_check_branch
    %306 = sbr.rel (0) target = $region33
  $region32: #{contrastive_encoder_forward.1} parent=0 // pred_region
    _
  $region33: #{contrastive_encoder_forward.1} parent=0 // pred_fallthru
    _
  // Predicated region
  $region34: #{contrastive_encoder_forward.1} parent=0 // pred_check
    _
  $region35: #{contrastive_encoder_forward.1} parent=0 // pred_check_branch
    %308 = sbr.rel (0) target = $region37
  $region36: #{contrastive_encoder_forward.1} parent=0 // pred_region
    _
  $region37: #{contrastive_encoder_forward.1} parent=0 // pred_fallthru
    _

</llo_original>
